<compile_context>
chip_gen: v6e
topology: v6e:2x2x1
jax: 0.10.0
libtpu: 0.0.40
codegen_flags: <defaults>
</compile_context>

<pallas_src>
import functools

import numpy as np
import jax
import jax.numpy as jnp
from jax.experimental import pallas as pl
from jax.experimental.pallas import tpu as pltpu

_LANES = 128      # lane width of the packed parameter buffers
_SUBLANES = 8     # f32 sublane tile


def _pad_up(n, m):
    return -(-n // m) * m


def _pack(named_arrays):
    """Row-pack 2-D arrays into one (rows, 128) f32 buffer, 8-row-aligned slots.

    Returns (buffer, {name: (row_offset, rows, cols)}).  In-kernel reads are
    static ref slices, so many tiny prologue DMAs collapse into one.
    """
    parts, offsets, row = [], {}, 0
    for name, a in named_arrays:
        a = np.asarray(a, np.float32)
        r, c = a.shape
        assert c <= _LANES, (name, a.shape)
        rp = _pad_up(r, _SUBLANES)
        slot = np.zeros((rp, _LANES), np.float32)
        slot[:r, :c] = a
        parts.append(slot)
        offsets[name] = (row, r, c)
        row += rp
    return np.concatenate(parts, axis=0), offsets


# ---------------------------------------------------------------------------
# Single fused kernel (no grid: everything resident in VMEM).
# ---------------------------------------------------------------------------
def _fused_kernel(x_ref, w_ref, c_ref, out_ref, xh_ref, *, woffs, coffs, nb_steps):
    f32 = jnp.float32

    def wslab(name):                          # bf16 matmul weight (static view)
        r0, r, c = woffs[name]
        return w_ref[r0:r0 + r, 0:c]

    def cslab(name):                          # f32 bias / constant table
        r0, r, c = coffs[name]
        return c_ref[r0:r0 + r, 0:c]

    def dense(a, wname, bname):
        # bf16 MXU operands, f32 accumulation, f32 bias (v5e-safe elementwise).
        return jnp.dot(a.astype(jnp.bfloat16), wslab(wname),
                       preferred_element_type=f32) + cslab(bname)

    x = x_ref[...]                            # (Bp, D) f32, batch padded to 8
    Bp, D = x.shape
    S = nb_steps

    # ---- embedding MLP (h never leaves VMEM) ----
    h = jnp.maximum(dense(x, "ew0", "eb0"), 0.0)
    h = jnp.maximum(dense(h, "ew1", "eb1"), 0.0)
    h = jnp.maximum(dense(h, "ew2", "eb2"), 0.0)
    h = jnp.maximum(dense(h, "ew3", "eb3"), 0.0)
    h = jnp.maximum(dense(h, "ew4", "eb4"), 0.0)          # (Bp, E)
    E = h.shape[1]
    DE = D + E

    # ---- replicate [x | h] across the S quadrature steps ----
    # Pure sublane-block stores into a VMEM staging buffer: no replication
    # matmuls, no iota/floor decode, no value reshape / lane concat.
    for s in range(S):                                    # static, tiny
        xh_ref[s * Bp:(s + 1) * Bp, 0:D] = x
        xh_ref[s * Bp:(s + 1) * Bp, D:DE] = h
    xh_t = xh_ref[:, 0:DE]                                # (S*Bp, D+E)
    x_t = xh_ref[:, 0:D]                                  # (S*Bp, D)

    # ---- UMNN integrand: ONE matmul per layer over all steps at once ----
    # Host-built "scale" holds t_k on the x lanes and 1.0 on the h lanes, so
    # row i of inp is [t_{i//Bp} * x_{i%Bp} | h_{i%Bp}] and the first layer is
    # a single matmul against the host-concatenated (D+E, Hm) weight "win".
    inp = xh_t * cslab("scale")
    a = jnp.maximum(dense(inp, "win", "b0"), 0.0)
    a = jnp.maximum(dense(a, "w1", "b1"), 0.0)
    a = jnp.maximum(dense(a, "w2", "b2"), 0.0)
    z = dense(a, "wo", "bo")                              # (S*Bp, D)
    # ELU(z) + 1 > 0 (monotone integrand); branch-exact: z+1 (z>0), exp(z) (z<=0)
    g = jnp.where(z > 0.0, z + 1.0, jnp.exp(jnp.minimum(z, 0.0)))

    # ---- quadrature: per-row integrand . x, then mean over steps ----
    s_rows = jnp.sum(g * x_t, axis=-1, keepdims=True)     # (S*Bp, 1)
    acc = jnp.dot(cslab("rmean"), s_rows,                 # (Bp, 1); 1/S folded in
                  preferred_element_type=f32)
    out_ref[...] = 1.0 / (1.0 + jnp.exp(-acc))            # exact torch.sigmoid


# ---------------------------------------------------------------------------
# Wrapper: host-side constant folding, parameter packing, pallas_call.
# ---------------------------------------------------------------------------
def embedding_net_forward(x, emb_params, umnn_params, nb_steps):
    B, D = x.shape
    Bp = _pad_up(B, _SUBLANES)                 # pad batch to the f32 sublane tile
    S = nb_steps
    ew0, eb0, ew1, eb1, ew2, eb2, ew3, eb3, ew4, eb4 = emb_params
    wx, wh, b0, w1, b1, w2, b2, wo, bo = umnn_params
    E = int(np.asarray(ew4).shape[1])
    DE = D + E

    # host-side constant folding
    win = np.concatenate([np.asarray(wx, np.float32),
                          np.asarray(wh, np.float32)], axis=0)       # (D+E, Hm)
    t = (np.arange(S, dtype=np.float32) + 0.5) / np.float32(S)       # midpoints
    scale = np.ones((S * Bp, DE), np.float32)
    scale[:, :D] = np.repeat(t, Bp)[:, None]                         # t per folded row
    rmean = np.zeros((Bp, S * Bp), np.float32)
    rmean[np.tile(np.arange(Bp), S), np.arange(S * Bp)] = 1.0 / np.float32(S)

    # pack into two aligned buffers (3 prologue DMAs total instead of ~20)
    w_np, woffs = _pack([("ew0", ew0), ("ew1", ew1), ("ew2", ew2),
                         ("ew3", ew3), ("ew4", ew4), ("win", win),
                         ("w1", w1), ("w2", w2), ("wo", wo)])
    c_np, coffs = _pack([("eb0", eb0), ("eb1", eb1), ("eb2", eb2),
                         ("eb3", eb3), ("eb4", eb4), ("b0", b0),
                         ("b1", b1), ("b2", b2), ("bo", bo),
                         ("scale", scale), ("rmean", rmean)])
    w_packed = jnp.asarray(w_np).astype(jnp.bfloat16)   # bf16 MXU operands
    c_packed = jnp.asarray(c_np)                        # f32 biases / tables

    x_pad = jnp.zeros((Bp, D), jnp.float32).at[:B].set(x.astype(jnp.float32))

    vmem = pltpu.MemorySpace.VMEM
    out = pl.pallas_call(
        functools.partial(_fused_kernel, woffs=woffs, coffs=coffs, nb_steps=S),
        out_shape=jax.ShapeDtypeStruct((Bp, 1), jnp.float32),
        in_specs=[pl.BlockSpec(memory_space=vmem)] * 3,
        out_specs=pl.BlockSpec(memory_space=vmem),
        scratch_shapes=[pltpu.VMEM((S * Bp, _LANES), jnp.float32)],   # [x|h] staging
        compiler_params=pltpu.CompilerParams(vmem_limit_bytes=8 * 1024 * 1024),
    )(x_pad, w_packed, c_packed)
    return out[:B]


# ---------------------------------------------------------------------------
# Pure-JAX references.
#   * reference_forward_f32: canonical per-step f32 semantics (module spec).
#   * reference_forward_bf16ops: mirrors the kernel's precision (bf16 matmul
#     operands, f32 accumulation / elementwise) for a tight structural check.
# ---------------------------------------------------------------------------
def reference_forward_f32(x, emb_params, umnn_params, nb_steps):
    h = x
    for i in range(0, len(emb_params), 2):
        h = jax.nn.relu(h @ emb_params[i] + emb_params[i + 1])
    wx, wh, b0, w1, b1, w2, b2, wo, bo = umnn_params
    acc = jnp.zeros((x.shape[0], 1), jnp.float32)
    for k in range(nb_steps):
        t = (k + 0.5) / nb_steps
        a = jax.nn.relu((x * t) @ wx + h @ wh + b0)
        a = jax.nn.relu(a @ w1 + b1)
        a = jax.nn.relu(a @ w2 + b2)
        z = a @ wo + bo
        g = jnp.where(z > 0.0, z + 1.0, jnp.exp(jnp.minimum(z, 0.0)))
        acc = acc + jnp.sum(g * x, axis=-1, keepdims=True)
    return jax.nn.sigmoid(acc / nb_steps)


def reference_forward_bf16ops(x, emb_params, umnn_params, nb_steps):
    def mm(a, w):
        return jnp.dot(a.astype(jnp.bfloat16), w.astype(jnp.bfloat16),
                       preferred_element_type=jnp.float32)
    h = x
    for i in range(0, len(emb_params), 2):
        h = jax.nn.relu(mm(h, emb_params[i]) + emb_params[i + 1])
    wx, wh, b0, w1, b1, w2, b2, wo, bo = umnn_params
    win = jnp.concatenate([wx, wh], axis=0)
    acc = jnp.zeros((x.shape[0], 1), jnp.float32)
    for k in range(nb_steps):
        t = (k + 0.5) / nb_steps
        inp = jnp.concatenate([x * t, h], axis=-1)
        a = jax.nn.relu(mm(inp, win) + b0)
        a = jax.nn.relu(mm(a, w1) + b1)
        a = jax.nn.relu(mm(a, w2) + b2)
        z = mm(a, wo) + bo
        g = jnp.where(z > 0.0, z + 1.0, jnp.exp(jnp.minimum(z, 0.0)))
        acc = acc + jnp.sum(g * x, axis=-1, keepdims=True)
    return jax.nn.sigmoid(acc / nb_steps)


# ---------------------------------------------------------------------------
# Deterministic parameter init (PyTorch-Linear-style uniform bounds).
# Weights stored [in_features, out_features] (transpose of nn.Linear storage).
# ---------------------------------------------------------------------------
def init_linear(key, fan_in, fan_out):
    kw, kb = jax.random.split(key)
    bound = fan_in ** -0.5
    w = jax.random.uniform(kw, (fan_in, fan_out), jnp.float32, -bound, bound)
    b = jax.random.uniform(kb, (1, fan_out), jnp.float32, -bound, bound)
    return w, b


if __name__ == "__main__":
    # small shapes consistent with the module's forward
    B = 4            # batch
    D = 8            # in_embedding == in_main (x feeds both nets)
    E = 4            # out_embedding
    He = 32          # num_embedding_hiddens
    Hm = 32          # num_main_hidden_nodes
    nb_steps = 10

    root = jax.random.PRNGKey(0)
    keys = jax.random.split(root, 16)

    # embedding_net: D->He, He->He (x3), He->E   (each followed by ReLU)
    emb_dims = [(D, He), (He, He), (He, He), (He, He), (He, E)]
    emb_params = []
    for i, (fi, fo) in enumerate(emb_dims):
        w, b = init_linear(keys[i], fi, fo)
        emb_params += [w, b]

    # UMNN integrand: (D + E)->Hm, Hm->Hm, Hm->Hm, Hm->D  (ELU+1 head)
    wx, _ = init_linear(keys[5], D, Hm)
    wh, b0 = init_linear(keys[6], E, Hm)
    w1, b1 = init_linear(keys[7], Hm, Hm)
    w2, b2 = init_linear(keys[8], Hm, Hm)
    wo, bo = init_linear(keys[9], Hm, D)
    umnn_params = [wx, wh, b0, w1, b1, w2, b2, wo, bo]

    x = jax.random.normal(keys[15], (B, D), jnp.float32)

    y = embedding_net_forward(x, emb_params, umnn_params, nb_steps)
    y = jax.block_until_ready(y)
    assert y.shape == (B, 1) and y.dtype == jnp.float32

    # tight check against the precision-matched reference, loose check against
    # the canonical f32 reference (only bf16-operand rounding separates them).
    y_bf = reference_forward_bf16ops(x, emb_params, umnn_params, nb_steps)
    y_f32 = reference_forward_f32(x, emb_params, umnn_params, nb_steps)
    assert jnp.allclose(y, y_bf, atol=2e-3, rtol=2e-3), (y, y_bf)
    assert jnp.allclose(y, y_f32, atol=5e-2, rtol=5e-2), (y, y_f32)
    print("KERNEL_OK")
</pallas_src>

<mosaic_0001>
module attributes {stable_mosaic.version = 11 : i64} {
  func.func @_fused_kernel(%arg0: memref<8x8xf32, #tpu.memory_space<vmem>>, %arg1: memref<248x128xbf16, #tpu.memory_space<vmem>>, %arg2: memref<160x128xf32, #tpu.memory_space<vmem>>, %arg3: memref<8x1xf32, #tpu.memory_space<vmem>>, %arg4: memref<80x128xf32, #tpu.memory_space<vmem>>) attributes {dimension_semantics = [], scalar_prefetch = 0 : i64, scratch_operands = 1 : i64, tpu.core_type = #tpu.core_type<tc>} {
    %c0 = arith.constant 0 : index
    %c0_0 = arith.constant 0 : index
    %0 = vector.load %arg0[%c0, %c0_0] : memref<8x8xf32, #tpu.memory_space<vmem>>, vector<8x8xf32>
    %1 = arith.truncf %0 : vector<8x8xf32> to vector<8x8xbf16>
    %c0_1 = arith.constant 0 : index
    %c0_2 = arith.constant 0 : index
    %2 = vector.load %arg1[%c0_1, %c0_2] : memref<248x128xbf16, #tpu.memory_space<vmem>>, vector<8x32xbf16>
    %cst = arith.constant dense<0.000000e+00> : vector<8x32xf32>
    %3 = tpu.matmul %1, %2, %cst {dimension_numbers = #tpu.dot_dimension_numbers<[1], [0], [0], [1], [0, 0, 1, 1], [], []>} : vector<8x8xbf16>, vector<8x32xbf16>, vector<8x32xf32> -> vector<8x32xf32>
    %c0_3 = arith.constant 0 : index
    %c0_4 = arith.constant 0 : index
    %4 = vector.load %arg2[%c0_3, %c0_4] : memref<160x128xf32, #tpu.memory_space<vmem>>, vector<1x32xf32>
    %5 = vector.broadcast %4 : vector<1x32xf32> to vector<8x32xf32>
    %6 = arith.addf %3, %5 : vector<8x32xf32>
    %cst_5 = arith.constant 0.000000e+00 : f32
    %7 = vector.broadcast %cst_5 : f32 to vector<8x32xf32>
    %8 = arith.maximumf %6, %7 : vector<8x32xf32>
    %9 = arith.truncf %8 : vector<8x32xf32> to vector<8x32xbf16>
    %c8 = arith.constant 8 : index
    %c0_6 = arith.constant 0 : index
    %10 = vector.load %arg1[%c8, %c0_6] : memref<248x128xbf16, #tpu.memory_space<vmem>>, vector<32x32xbf16>
    %cst_7 = arith.constant dense<0.000000e+00> : vector<8x32xf32>
    %11 = tpu.matmul %9, %10, %cst_7 {dimension_numbers = #tpu.dot_dimension_numbers<[1], [0], [0], [1], [0, 0, 1, 1], [], []>} : vector<8x32xbf16>, vector<32x32xbf16>, vector<8x32xf32> -> vector<8x32xf32>
    %c8_8 = arith.constant 8 : index
    %c0_9 = arith.constant 0 : index
    %12 = vector.load %arg2[%c8_8, %c0_9] : memref<160x128xf32, #tpu.memory_space<vmem>>, vector<1x32xf32>
    %13 = vector.broadcast %12 : vector<1x32xf32> to vector<8x32xf32>
    %14 = arith.addf %11, %13 : vector<8x32xf32>
    %cst_10 = arith.constant 0.000000e+00 : f32
    %15 = vector.broadcast %cst_10 : f32 to vector<8x32xf32>
    %16 = arith.maximumf %14, %15 : vector<8x32xf32>
    %17 = arith.truncf %16 : vector<8x32xf32> to vector<8x32xbf16>
    %c40 = arith.constant 40 : index
    %c0_11 = arith.constant 0 : index
    %18 = vector.load %arg1[%c40, %c0_11] : memref<248x128xbf16, #tpu.memory_space<vmem>>, vector<32x32xbf16>
    %cst_12 = arith.constant dense<0.000000e+00> : vector<8x32xf32>
    %19 = tpu.matmul %17, %18, %cst_12 {dimension_numbers = #tpu.dot_dimension_numbers<[1], [0], [0], [1], [0, 0, 1, 1], [], []>} : vector<8x32xbf16>, vector<32x32xbf16>, vector<8x32xf32> -> vector<8x32xf32>
    %c16 = arith.constant 16 : index
    %c0_13 = arith.constant 0 : index
    %20 = vector.load %arg2[%c16, %c0_13] : memref<160x128xf32, #tpu.memory_space<vmem>>, vector<1x32xf32>
    %21 = vector.broadcast %20 : vector<1x32xf32> to vector<8x32xf32>
    %22 = arith.addf %19, %21 : vector<8x32xf32>
    %cst_14 = arith.constant 0.000000e+00 : f32
    %23 = vector.broadcast %cst_14 : f32 to vector<8x32xf32>
    %24 = arith.maximumf %22, %23 : vector<8x32xf32>
    %25 = arith.truncf %24 : vector<8x32xf32> to vector<8x32xbf16>
    %c72 = arith.constant 72 : index
    %c0_15 = arith.constant 0 : index
    %26 = vector.load %arg1[%c72, %c0_15] : memref<248x128xbf16, #tpu.memory_space<vmem>>, vector<32x32xbf16>
    %cst_16 = arith.constant dense<0.000000e+00> : vector<8x32xf32>
    %27 = tpu.matmul %25, %26, %cst_16 {dimension_numbers = #tpu.dot_dimension_numbers<[1], [0], [0], [1], [0, 0, 1, 1], [], []>} : vector<8x32xbf16>, vector<32x32xbf16>, vector<8x32xf32> -> vector<8x32xf32>
    %c24 = arith.constant 24 : index
    %c0_17 = arith.constant 0 : index
    %28 = vector.load %arg2[%c24, %c0_17] : memref<160x128xf32, #tpu.memory_space<vmem>>, vector<1x32xf32>
    %29 = vector.broadcast %28 : vector<1x32xf32> to vector<8x32xf32>
    %30 = arith.addf %27, %29 : vector<8x32xf32>
    %cst_18 = arith.constant 0.000000e+00 : f32
    %31 = vector.broadcast %cst_18 : f32 to vector<8x32xf32>
    %32 = arith.maximumf %30, %31 : vector<8x32xf32>
    %33 = arith.truncf %32 : vector<8x32xf32> to vector<8x32xbf16>
    %c104 = arith.constant 104 : index
    %c0_19 = arith.constant 0 : index
    %34 = vector.load %arg1[%c104, %c0_19] : memref<248x128xbf16, #tpu.memory_space<vmem>>, vector<32x4xbf16>
    %cst_20 = arith.constant dense<0.000000e+00> : vector<8x4xf32>
    %35 = tpu.matmul %33, %34, %cst_20 {dimension_numbers = #tpu.dot_dimension_numbers<[1], [0], [0], [1], [0, 0, 1, 1], [], []>} : vector<8x32xbf16>, vector<32x4xbf16>, vector<8x4xf32> -> vector<8x4xf32>
    %c32 = arith.constant 32 : index
    %c0_21 = arith.constant 0 : index
    %36 = vector.load %arg2[%c32, %c0_21] : memref<160x128xf32, #tpu.memory_space<vmem>>, vector<1x4xf32>
    %37 = vector.broadcast %36 : vector<1x4xf32> to vector<8x4xf32>
    %38 = arith.addf %35, %37 : vector<8x4xf32>
    %cst_22 = arith.constant 0.000000e+00 : f32
    %39 = vector.broadcast %cst_22 : f32 to vector<8x4xf32>
    %40 = arith.maximumf %38, %39 : vector<8x4xf32>
    %c0_23 = arith.constant 0 : index
    %c0_24 = arith.constant 0 : index
    %41 = vector.load %arg4[%c0_23, %c0_24] : memref<80x128xf32, #tpu.memory_space<vmem>>, vector<8x8xf32>
    tpu.vector_store %arg4[%c0_23, %c0_24], %0 {strides = array<i32>} : memref<80x128xf32, #tpu.memory_space<vmem>>, vector<8x8xf32>,
    %c0_25 = arith.constant 0 : index
    %c8_26 = arith.constant 8 : index
    %42 = vector.load %arg4[%c0_25, %c8_26] : memref<80x128xf32, #tpu.memory_space<vmem>>, vector<8x4xf32>
    tpu.vector_store %arg4[%c0_25, %c8_26], %40 {strides = array<i32>} : memref<80x128xf32, #tpu.memory_space<vmem>>, vector<8x4xf32>,
    %c8_27 = arith.constant 8 : index
    %c0_28 = arith.constant 0 : index
    %43 = vector.load %arg4[%c8_27, %c0_28] : memref<80x128xf32, #tpu.memory_space<vmem>>, vector<8x8xf32>
    tpu.vector_store %arg4[%c8_27, %c0_28], %0 {strides = array<i32>} : memref<80x128xf32, #tpu.memory_space<vmem>>, vector<8x8xf32>,
    %c8_29 = arith.constant 8 : index
    %c8_30 = arith.constant 8 : index
    %44 = vector.load %arg4[%c8_29, %c8_30] : memref<80x128xf32, #tpu.memory_space<vmem>>, vector<8x4xf32>
    tpu.vector_store %arg4[%c8_29, %c8_30], %40 {strides = array<i32>} : memref<80x128xf32, #tpu.memory_space<vmem>>, vector<8x4xf32>,
    %c16_31 = arith.constant 16 : index
    %c0_32 = arith.constant 0 : index
    %45 = vector.load %arg4[%c16_31, %c0_32] : memref<80x128xf32, #tpu.memory_space<vmem>>, vector<8x8xf32>
    tpu.vector_store %arg4[%c16_31, %c0_32], %0 {strides = array<i32>} : memref<80x128xf32, #tpu.memory_space<vmem>>, vector<8x8xf32>,
    %c16_33 = arith.constant 16 : index
    %c8_34 = arith.constant 8 : index
    %46 = vector.load %arg4[%c16_33, %c8_34] : memref<80x128xf32, #tpu.memory_space<vmem>>, vector<8x4xf32>
    tpu.vector_store %arg4[%c16_33, %c8_34], %40 {strides = array<i32>} : memref<80x128xf32, #tpu.memory_space<vmem>>, vector<8x4xf32>,
    %c24_35 = arith.constant 24 : index
    %c0_36 = arith.constant 0 : index
    %47 = vector.load %arg4[%c24_35, %c0_36] : memref<80x128xf32, #tpu.memory_space<vmem>>, vector<8x8xf32>
    tpu.vector_store %arg4[%c24_35, %c0_36], %0 {strides = array<i32>} : memref<80x128xf32, #tpu.memory_space<vmem>>, vector<8x8xf32>,
    %c24_37 = arith.constant 24 : index
    %c8_38 = arith.constant 8 : index
    %48 = vector.load %arg4[%c24_37, %c8_38] : memref<80x128xf32, #tpu.memory_space<vmem>>, vector<8x4xf32>
    tpu.vector_store %arg4[%c24_37, %c8_38], %40 {strides = array<i32>} : memref<80x128xf32, #tpu.memory_space<vmem>>, vector<8x4xf32>,
    %c32_39 = arith.constant 32 : index
    %c0_40 = arith.constant 0 : index
    %49 = vector.load %arg4[%c32_39, %c0_40] : memref<80x128xf32, #tpu.memory_space<vmem>>, vector<8x8xf32>
    tpu.vector_store %arg4[%c32_39, %c0_40], %0 {strides = array<i32>} : memref<80x128xf32, #tpu.memory_space<vmem>>, vector<8x8xf32>,
    %c32_41 = arith.constant 32 : index
    %c8_42 = arith.constant 8 : index
    %50 = vector.load %arg4[%c32_41, %c8_42] : memref<80x128xf32, #tpu.memory_space<vmem>>, vector<8x4xf32>
    tpu.vector_store %arg4[%c32_41, %c8_42], %40 {strides = array<i32>} : memref<80x128xf32, #tpu.memory_space<vmem>>, vector<8x4xf32>,
    %c40_43 = arith.constant 40 : index
    %c0_44 = arith.constant 0 : index
    %51 = vector.load %arg4[%c40_43, %c0_44] : memref<80x128xf32, #tpu.memory_space<vmem>>, vector<8x8xf32>
    tpu.vector_store %arg4[%c40_43, %c0_44], %0 {strides = array<i32>} : memref<80x128xf32, #tpu.memory_space<vmem>>, vector<8x8xf32>,
    %c40_45 = arith.constant 40 : index
    %c8_46 = arith.constant 8 : index
    %52 = vector.load %arg4[%c40_45, %c8_46] : memref<80x128xf32, #tpu.memory_space<vmem>>, vector<8x4xf32>
    tpu.vector_store %arg4[%c40_45, %c8_46], %40 {strides = array<i32>} : memref<80x128xf32, #tpu.memory_space<vmem>>, vector<8x4xf32>,
    %c48 = arith.constant 48 : index
    %c0_47 = arith.constant 0 : index
    %53 = vector.load %arg4[%c48, %c0_47] : memref<80x128xf32, #tpu.memory_space<vmem>>, vector<8x8xf32>
    tpu.vector_store %arg4[%c48, %c0_47], %0 {strides = array<i32>} : memref<80x128xf32, #tpu.memory_space<vmem>>, vector<8x8xf32>,
    %c48_48 = arith.constant 48 : index
    %c8_49 = arith.constant 8 : index
    %54 = vector.load %arg4[%c48_48, %c8_49] : memref<80x128xf32, #tpu.memory_space<vmem>>, vector<8x4xf32>
    tpu.vector_store %arg4[%c48_48, %c8_49], %40 {strides = array<i32>} : memref<80x128xf32, #tpu.memory_space<vmem>>, vector<8x4xf32>,
    %c56 = arith.constant 56 : index
    %c0_50 = arith.constant 0 : index
    %55 = vector.load %arg4[%c56, %c0_50] : memref<80x128xf32, #tpu.memory_space<vmem>>, vector<8x8xf32>
    tpu.vector_store %arg4[%c56, %c0_50], %0 {strides = array<i32>} : memref<80x128xf32, #tpu.memory_space<vmem>>, vector<8x8xf32>,
    %c56_51 = arith.constant 56 : index
    %c8_52 = arith.constant 8 : index
    %56 = vector.load %arg4[%c56_51, %c8_52] : memref<80x128xf32, #tpu.memory_space<vmem>>, vector<8x4xf32>
    tpu.vector_store %arg4[%c56_51, %c8_52], %40 {strides = array<i32>} : memref<80x128xf32, #tpu.memory_space<vmem>>, vector<8x4xf32>,
    %c64 = arith.constant 64 : index
    %c0_53 = arith.constant 0 : index
    %57 = vector.load %arg4[%c64, %c0_53] : memref<80x128xf32, #tpu.memory_space<vmem>>, vector<8x8xf32>
    tpu.vector_store %arg4[%c64, %c0_53], %0 {strides = array<i32>} : memref<80x128xf32, #tpu.memory_space<vmem>>, vector<8x8xf32>,
    %c64_54 = arith.constant 64 : index
    %c8_55 = arith.constant 8 : index
    %58 = vector.load %arg4[%c64_54, %c8_55] : memref<80x128xf32, #tpu.memory_space<vmem>>, vector<8x4xf32>
    tpu.vector_store %arg4[%c64_54, %c8_55], %40 {strides = array<i32>} : memref<80x128xf32, #tpu.memory_space<vmem>>, vector<8x4xf32>,
    %c72_56 = arith.constant 72 : index
    %c0_57 = arith.constant 0 : index
    %59 = vector.load %arg4[%c72_56, %c0_57] : memref<80x128xf32, #tpu.memory_space<vmem>>, vector<8x8xf32>
    tpu.vector_store %arg4[%c72_56, %c0_57], %0 {strides = array<i32>} : memref<80x128xf32, #tpu.memory_space<vmem>>, vector<8x8xf32>,
    %c72_58 = arith.constant 72 : index
    %c8_59 = arith.constant 8 : index
    %60 = vector.load %arg4[%c72_58, %c8_59] : memref<80x128xf32, #tpu.memory_space<vmem>>, vector<8x4xf32>
    tpu.vector_store %arg4[%c72_58, %c8_59], %40 {strides = array<i32>} : memref<80x128xf32, #tpu.memory_space<vmem>>, vector<8x4xf32>,
    %c0_60 = arith.constant 0 : index
    %c0_61 = arith.constant 0 : index
    %61 = vector.load %arg4[%c0_60, %c0_61] : memref<80x128xf32, #tpu.memory_space<vmem>>, vector<80x12xf32>
    %c0_62 = arith.constant 0 : index
    %c0_63 = arith.constant 0 : index
    %62 = vector.load %arg4[%c0_62, %c0_63] : memref<80x128xf32, #tpu.memory_space<vmem>>, vector<80x8xf32>
    %c72_64 = arith.constant 72 : index
    %c0_65 = arith.constant 0 : index
    %63 = vector.load %arg2[%c72_64, %c0_65] : memref<160x128xf32, #tpu.memory_space<vmem>>, vector<80x12xf32>
    %64 = arith.mulf %61, %63 : vector<80x12xf32>
    %65 = arith.truncf %64 : vector<80x12xf32> to vector<80x12xbf16>
    %c136 = arith.constant 136 : index
    %c0_66 = arith.constant 0 : index
    %66 = vector.load %arg1[%c136, %c0_66] : memref<248x128xbf16, #tpu.memory_space<vmem>>, vector<12x32xbf16>
    %cst_67 = arith.constant dense<0.000000e+00> : vector<80x32xf32>
    %67 = tpu.matmul %65, %66, %cst_67 {dimension_numbers = #tpu.dot_dimension_numbers<[1], [0], [0], [1], [0, 0, 1, 1], [], []>} : vector<80x12xbf16>, vector<12x32xbf16>, vector<80x32xf32> -> vector<80x32xf32>
    %c40_68 = arith.constant 40 : index
    %c0_69 = arith.constant 0 : index
    %68 = vector.load %arg2[%c40_68, %c0_69] : memref<160x128xf32, #tpu.memory_space<vmem>>, vector<1x32xf32>
    %69 = vector.broadcast %68 : vector<1x32xf32> to vector<80x32xf32>
    %70 = arith.addf %67, %69 : vector<80x32xf32>
    %cst_70 = arith.constant 0.000000e+00 : f32
    %71 = vector.broadcast %cst_70 : f32 to vector<80x32xf32>
    %72 = arith.maximumf %70, %71 : vector<80x32xf32>
    %73 = arith.truncf %72 : vector<80x32xf32> to vector<80x32xbf16>
    %c152 = arith.constant 152 : index
    %c0_71 = arith.constant 0 : index
    %74 = vector.load %arg1[%c152, %c0_71] : memref<248x128xbf16, #tpu.memory_space<vmem>>, vector<32x32xbf16>
    %cst_72 = arith.constant dense<0.000000e+00> : vector<80x32xf32>
    %75 = tpu.matmul %73, %74, %cst_72 {dimension_numbers = #tpu.dot_dimension_numbers<[1], [0], [0], [1], [0, 0, 1, 1], [], []>} : vector<80x32xbf16>, vector<32x32xbf16>, vector<80x32xf32> -> vector<80x32xf32>
    %c48_73 = arith.constant 48 : index
    %c0_74 = arith.constant 0 : index
    %76 = vector.load %arg2[%c48_73, %c0_74] : memref<160x128xf32, #tpu.memory_space<vmem>>, vector<1x32xf32>
    %77 = vector.broadcast %76 : vector<1x32xf32> to vector<80x32xf32>
    %78 = arith.addf %75, %77 : vector<80x32xf32>
    %cst_75 = arith.constant 0.000000e+00 : f32
    %79 = vector.broadcast %cst_75 : f32 to vector<80x32xf32>
    %80 = arith.maximumf %78, %79 : vector<80x32xf32>
    %81 = arith.truncf %80 : vector<80x32xf32> to vector<80x32xbf16>
    %c184 = arith.constant 184 : index
    %c0_76 = arith.constant 0 : index
    %82 = vector.load %arg1[%c184, %c0_76] : memref<248x128xbf16, #tpu.memory_space<vmem>>, vector<32x32xbf16>
    %cst_77 = arith.constant dense<0.000000e+00> : vector<80x32xf32>
    %83 = tpu.matmul %81, %82, %cst_77 {dimension_numbers = #tpu.dot_dimension_numbers<[1], [0], [0], [1], [0, 0, 1, 1], [], []>} : vector<80x32xbf16>, vector<32x32xbf16>, vector<80x32xf32> -> vector<80x32xf32>
    %c56_78 = arith.constant 56 : index
    %c0_79 = arith.constant 0 : index
    %84 = vector.load %arg2[%c56_78, %c0_79] : memref<160x128xf32, #tpu.memory_space<vmem>>, vector<1x32xf32>
    %85 = vector.broadcast %84 : vector<1x32xf32> to vector<80x32xf32>
    %86 = arith.addf %83, %85 : vector<80x32xf32>
    %cst_80 = arith.constant 0.000000e+00 : f32
    %87 = vector.broadcast %cst_80 : f32 to vector<80x32xf32>
    %88 = arith.maximumf %86, %87 : vector<80x32xf32>
    %89 = arith.truncf %88 : vector<80x32xf32> to vector<80x32xbf16>
    %c216 = arith.constant 216 : index
    %c0_81 = arith.constant 0 : index
    %90 = vector.load %arg1[%c216, %c0_81] : memref<248x128xbf16, #tpu.memory_space<vmem>>, vector<32x8xbf16>
    %cst_82 = arith.constant dense<0.000000e+00> : vector<80x8xf32>
    %91 = tpu.matmul %89, %90, %cst_82 {dimension_numbers = #tpu.dot_dimension_numbers<[1], [0], [0], [1], [0, 0, 1, 1], [], []>} : vector<80x32xbf16>, vector<32x8xbf16>, vector<80x8xf32> -> vector<80x8xf32>
    %c64_83 = arith.constant 64 : index
    %c0_84 = arith.constant 0 : index
    %92 = vector.load %arg2[%c64_83, %c0_84] : memref<160x128xf32, #tpu.memory_space<vmem>>, vector<1x8xf32>
    %93 = vector.broadcast %92 : vector<1x8xf32> to vector<80x8xf32>
    %94 = arith.addf %91, %93 : vector<80x8xf32>
    %cst_85 = arith.constant 0.000000e+00 : f32
    %95 = vector.broadcast %cst_85 : f32 to vector<80x8xf32>
    %96 = arith.cmpf ogt, %94, %95 : vector<80x8xf32>
    %cst_86 = arith.constant 1.000000e+00 : f32
    %97 = vector.broadcast %cst_86 : f32 to vector<80x8xf32>
    %98 = arith.addf %94, %97 : vector<80x8xf32>
    %cst_87 = arith.constant 0.000000e+00 : f32
    %99 = vector.broadcast %cst_87 : f32 to vector<80x8xf32>
    %100 = arith.minimumf %94, %99 : vector<80x8xf32>
    %101 = math.exp %100 : vector<80x8xf32>
    %102 = arith.select %96, %98, %101 : vector<80x8xi1>, vector<80x8xf32>
    %103 = arith.mulf %102, %62 : vector<80x8xf32>
    %cst_88 = arith.constant dense<0.000000e+00> : vector<80xf32>
    %104 = vector.multi_reduction <add>, %103, %cst_88 [1] : vector<80x8xf32> to vector<80xf32>
    %105 = vector.shape_cast %104 : vector<80xf32> to vector<80x1xf32>
    %c152_89 = arith.constant 152 : index
    %c0_90 = arith.constant 0 : index
    %106 = vector.load %arg2[%c152_89, %c0_90] : memref<160x128xf32, #tpu.memory_space<vmem>>, vector<8x80xf32>
    %cst_91 = arith.constant dense<0.000000e+00> : vector<8x1xf32>
    %107 = tpu.matmul %106, %105, %cst_91 {dimension_numbers = #tpu.dot_dimension_numbers<[1], [0], [0], [1], [0, 0, 1, 1], [], []>} : vector<8x80xf32>, vector<80x1xf32>, vector<8x1xf32> -> vector<8x1xf32>
    %cst_92 = arith.constant 0.000000e+00 : f32
    %108 = vector.broadcast %cst_92 : f32 to vector<8x1xf32>
    %109 = arith.subf %108, %107 : vector<8x1xf32>
    %110 = math.exp %109 : vector<8x1xf32>
    %cst_93 = arith.constant 1.000000e+00 : f32
    %111 = vector.broadcast %cst_93 : f32 to vector<8x1xf32>
    %112 = arith.addf %111, %110 : vector<8x1xf32>
    %cst_94 = arith.constant 1.000000e+00 : f32
    %113 = vector.broadcast %cst_94 : f32 to vector<8x1xf32>
    %114 = arith.divf %113, %112 : vector<8x1xf32>
    %c0_95 = arith.constant 0 : index
    %c0_96 = arith.constant 0 : index
    %115 = vector.load %arg3[%c0_95, %c0_96] : memref<8x1xf32, #tpu.memory_space<vmem>>, vector<8x1xf32>
    tpu.vector_store %arg3[%c0_95, %c0_96], %114 {strides = array<i32>} : memref<8x1xf32, #tpu.memory_space<vmem>>, vector<8x1xf32>,
    return
  }
}

</mosaic_0001>

<llo_original>
// kernel: tpu_custom_call.1
$region0: #{tpu_custom_call.1}
  #allocation0 [shape = 'u32[]', space=smem, size = 0x4, offset = 0x4, fixed_abs, tag = 'smem constant byte address 0x4 - core index']
  #allocation1 [shape = 'u32[144,128]{1,0:T(1,128)}', space=vmem, size = 0x12000, scoped, tag = 'internal scratch']
  #allocation2 [shape = 'f32[80,128]{1,0:T(8,128)}', space=vmem, size = 0xa000, scoped, tag = 'scratch operand']
  %s0 = inlined_call_operand.hbm [shape: f32[8,8], index: 0, kind: input, shape index: {}]
  %s1 = inlined_call_operand.hbm [shape: bf16[248,128], index: 1, kind: input, shape index: {}]
  %s2 = inlined_call_operand.hbm [shape: f32[160,128], index: 2, kind: input, shape index: {}]
  %s3 = inlined_call_operand.vmem [shape: f32[8,1], index: 3, kind: output, shape index: {}]
  %s4 = sld [smem:[#allocation0]]
  $region34: #{tpu_custom_call.1} parent=0
    _
  %s6 = ssub.s32 1, %s4
  %s7 = scalar_select 0, %s6, %s4
  $region1: #{tpu_custom_call.1} parent=0
    #allocation3 [shape = 'u8[4096]{0}', space=vmem, size = 0x1000, scoped, tag = 'input window, operand 0, single buffered']
    #allocation4 [shape = 's32[1]{0}', space=sflag, size = 0x4, scoped, tag = 'scoped memory for tpu_custom_call.1']
    #allocation5 [shape = 'u8[63488]{0}', space=vmem, size = 0xf800, scoped, tag = 'input window, operand 1, single buffered']
    #allocation6 [shape = 's32[1]{0}', space=sflag, size = 0x4, scoped, tag = 'scoped memory for tpu_custom_call.1']
    #allocation7 [shape = 'u8[81920]{0}', space=vmem, size = 0x14000, scoped, tag = 'input window, operand 2, single buffered']
    %8 = vsyncpa [#allocation4], 0
    %9 = vsyncpa [#allocation6], 0
    // Predicated region
    $region2: #{tpu_custom_call.1} parent=1 // pred_check
      _
    $region3: #{tpu_custom_call.1} parent=1 // pred_check_branch
      %11 = sbr.rel (0) target = $region5
    $region4: #{tpu_custom_call.1} parent=1 // pred_region
      %s13 = ssub.s32 128, 128
      %14 = vsyncadd [#allocation4], %s13
      %s16 = sshll.u32 [#allocation3], 4
      %s17 = int_to_ptr.vmem [resolvable:$true] %s16
      %19 = dma.hbm_to_vmem [thread:$0]  %s0, 128, %s17, [#allocation4]
    $region5: #{tpu_custom_call.1} parent=1 // pred_fallthru
      _
    // Predicated region
    $region6: #{tpu_custom_call.1} parent=1 // pred_check
      _
    $region7: #{tpu_custom_call.1} parent=1 // pred_check_branch
      %21 = sbr.rel (0) target = $region9
    $region8: #{tpu_custom_call.1} parent=1 // pred_region
      %s23 = ssub.s32 1984, 1984
      %24 = vsyncadd [#allocation6], %s23
      %s25 = sshll.u32 [#allocation5], 4
      %s26 = int_to_ptr.vmem [resolvable:$true] %s25
      %31 = dma.hbm_to_vmem [thread:$0]  %s1, 1984, %s26, [#allocation6], 64, 64, 4
    $region9: #{tpu_custom_call.1} parent=1 // pred_fallthru
      _
    // Predicated region
    $region10: #{tpu_custom_call.1} parent=1 // pred_check
      _
    $region11: #{tpu_custom_call.1} parent=1 // pred_check_branch
      %33 = sbr.rel (0) target = $region13
    $region12: #{tpu_custom_call.1} parent=1 // pred_region
      %s35 = ssub.s32 2560, 2560
      %36 = vsyncadd [#allocation6], %s35
      %s37 = sshll.u32 [#allocation7], 4
      %s38 = int_to_ptr.vmem [resolvable:$true] %s37
      %43 = dma.hbm_to_vmem [thread:$0]  %s2, 2560, %s38, [#allocation6], 128, 128, 8
    $region13: #{tpu_custom_call.1} parent=1 // pred_fallthru
      _
    // Predicated region
    $region14: #{tpu_custom_call.1} parent=1 // pred_check
      _
    $region15: #{tpu_custom_call.1} parent=1 // pred_check_branch
      %45 = sbr.rel (0) target = $region17
    $region16: #{tpu_custom_call.1} parent=1 // pred_region
      %46 = dma.done [#allocation4], 128
    $region17: #{tpu_custom_call.1} parent=1 // pred_fallthru
      _
    // Predicated region
    $region18: #{tpu_custom_call.1} parent=1 // pred_check
      _
    $region19: #{tpu_custom_call.1} parent=1 // pred_check_branch
      %48 = sbr.rel (0) target = $region21
    $region20: #{tpu_custom_call.1} parent=1 // pred_region
      %49 = dma.done [#allocation6], 1984
    $region21: #{tpu_custom_call.1} parent=1 // pred_fallthru
      _
    // Predicated region
    $region22: #{tpu_custom_call.1} parent=1 // pred_check
      _
    $region23: #{tpu_custom_call.1} parent=1 // pred_check_branch
      %51 = sbr.rel (0) target = $region25
    $region24: #{tpu_custom_call.1} parent=1 // pred_region
      %52 = dma.done [#allocation6], 2560
    $region25: #{tpu_custom_call.1} parent=1 // pred_fallthru
      _
    %v54 = vld [vmem:[#allocation3] sm:$0xff]
    %v55 = vpack.c.bf16 %v54, %v54
    %v56 = vld [vmem:[#allocation5] sm:$0xf]
    %v57 = vld [vmem:[#allocation7] sm:$0x1]
    %v58 = vlaneseq
    %v59 = vshrl.u32 %v58, 7
    %v60 = vsub.s32 0, %v59
    %v61 = vrot.slane %v57, %v60
    %vm62 = vcmask 64512
    %v64 = vsel %vm62, %v55, 0
    %vm66 = vcmask 1043456
    %v68 = vsel %vm66, %v56, 0
    %70 = vmatprep.subr.bf16.mxu0 0
    %71 = vmatpush1.bf16.msra.mxu0 0
    %72 = vmatprep.subr.bf16.mxu0 0
    %73 = vmatpush1.bf16.msra.mxu0 0
    %74 = vmatprep.subr.bf16.mxu0 0
    %75 = vmatpush1.bf16.msra.mxu0 0
    %76 = vmatprep.subr.bf16.mxu0 0
    %77 = vmatpush1.bf16.msra.mxu0 0
    %78 = vmatprep.subr.bf16.mxu0 0
    %79 = vmatpush1.bf16.msra.mxu0 0
    %80 = vmatprep.subr.bf16.mxu0 0
    %81 = vmatpush1.bf16.msra.mxu0 0
    %82 = vmatprep.subr.bf16.mxu0 0
    %83 = vmatpush1.bf16.msra.mxu0 0
    %84 = vmatprep.subr.bf16.mxu0 0
    %85 = vmatpush1.bf16.msra.mxu0 %v68
    %86 = vmatprep.subr.bf16.mxu0 0
    %87 = vmatpush2.bf16.msra.mxu0 0
    %88 = vmatprep.subr.bf16.mxu0 0
    %89 = vmatpush2.bf16.msra.mxu0 0
    %90 = vmatprep.subr.bf16.mxu0 0
    %91 = vmatpush2.bf16.msra.mxu0 0
    %92 = vmatprep.subr.bf16.mxu0 0
    %93 = vmatpush2.bf16.msra.mxu0 0
    %94 = vmatprep.subr.bf16.mxu0 0
    %95 = vmatpush2.bf16.msra.mxu0 0
    %96 = vmatprep.subr.bf16.mxu0 0
    %97 = vmatpush2.bf16.msra.mxu0 0
    %98 = vmatprep.subr.bf16.mxu0 0
    %99 = vmatpush2.bf16.msra.mxu0 0
    %100 = vmatprep.subr.bf16.mxu0 0
    %101 = vmatpush2.bf16.msra.mxu0 0
    %102 = vmatprep.mubr.bf16.mxu0 0
    %103 = vmatmul.mubr.bf16.gmra.mxu0 %v64
    %v104 = vpop.f32.mrf.mxu0
    %v105 = vadd.f32 %v61, %v104
    %v106 = vpop.f32.mrf.mxu0
    %v107 = vpop.f32.mrf.mxu0
    %v108 = vpop.f32.mrf.mxu0
    %109 = vdwg.mxu0
    %v110 = vmax.f32 %v105, 0.0
    %v111 = vpack.c.bf16 %v110, %v110
    %v112 = vld [vmem:[#allocation5 + $0x4] sm:$0xf]
    %v113 = vld [vmem:[#allocation5 + $0x8] sm:$0xf]
    %v114 = vld [vmem:[#allocation5 + $0xc] sm:$0xf]
    %v115 = vld [vmem:[#allocation5 + $0x10] sm:$0xf]
    %v116 = vld [vmem:[#allocation7 + $0x8] sm:$0x1]
    %v117 = vlaneseq
    %v118 = vshrl.u32 %v117, 7
    %v119 = vsub.s32 0, %v118
    %v120 = vrot.slane %v116, %v119
    %v125 = vunpack.c.l.b16 %v112
    %v126 = vunpack.c.l.b16 %v113
    %v127 = vunpack.c.l.b16 %v114
    %v128 = vunpack.c.l.b16 %v115
    %v129 = vpack.c.b16 %v126, %v125
    %v130 = vpack.c.b16 %v128, %v127
    %vm133 = vcmask 261120
    %v135 = vsel %vm133, %v111, 0
    %137 = vmatprep.subr.bf16.mxu0 0
    %138 = vmatpush1.bf16.msra.mxu0 0
    %139 = vmatprep.subr.bf16.mxu0 0
    %140 = vmatpush1.bf16.msra.mxu0 0
    %141 = vmatprep.subr.bf16.mxu0 0
    %142 = vmatpush1.bf16.msra.mxu0 0
    %143 = vmatprep.subr.bf16.mxu0 0
    %144 = vmatpush1.bf16.msra.mxu0 0
    %145 = vmatprep.subr.bf16.mxu0 0
    %146 = vmatpush1.bf16.msra.mxu0 0
    %147 = vmatprep.subr.bf16.mxu0 0
    %148 = vmatpush1.bf16.msra.mxu0 0
    %149 = vmatprep.subr.bf16.mxu0 0
    %150 = vmatpush1.bf16.msra.mxu0 %v130
    %151 = vmatprep.subr.bf16.mxu0 0
    %152 = vmatpush1.bf16.msra.mxu0 %v129
    %153 = vmatprep.subr.bf16.mxu0 0
    %154 = vmatpush2.bf16.msra.mxu0 0
    %155 = vmatprep.subr.bf16.mxu0 0
    %156 = vmatpush2.bf16.msra.mxu0 0
    %157 = vmatprep.subr.bf16.mxu0 0
    %158 = vmatpush2.bf16.msra.mxu0 0
    %159 = vmatprep.subr.bf16.mxu0 0
    %160 = vmatpush2.bf16.msra.mxu0 0
    %161 = vmatprep.subr.bf16.mxu0 0
    %162 = vmatpush2.bf16.msra.mxu0 0
    %163 = vmatprep.subr.bf16.mxu0 0
    %164 = vmatpush2.bf16.msra.mxu0 0
    %165 = vmatprep.subr.bf16.mxu0 0
    %166 = vmatpush2.bf16.msra.mxu0 0
    %167 = vmatprep.subr.bf16.mxu0 0
    %168 = vmatpush2.bf16.msra.mxu0 0
    %169 = vmatprep.mubr.bf16.mxu0 0
    %170 = vmatmul.mubr.bf16.gmra.mxu0 %v135
    %v171 = vpop.f32.mrf.mxu0
    %v172 = vadd.f32 %v120, %v171
    %v173 = vpop.f32.mrf.mxu0
    %v174 = vpop.f32.mrf.mxu0
    %v175 = vpop.f32.mrf.mxu0
    %176 = vdwg.mxu0
    %v177 = vmax.f32 %v172, 0.0
    %v178 = vpack.c.bf16 %v177, %v177
    %v179 = vld [vmem:[#allocation5 + $0x14] sm:$0xf]
    %v180 = vld [vmem:[#allocation5 + $0x18] sm:$0xf]
    %v181 = vld [vmem:[#allocation5 + $0x1c] sm:$0xf]
    %v182 = vld [vmem:[#allocation5 + $0x20] sm:$0xf]
    %v183 = vld [vmem:[#allocation7 + $0x10] sm:$0x1]
    %v184 = vlaneseq
    %v185 = vshrl.u32 %v184, 7
    %v186 = vsub.s32 0, %v185
    %v187 = vrot.slane %v183, %v186
    %v192 = vunpack.c.l.b16 %v179
    %v193 = vunpack.c.l.b16 %v180
    %v194 = vunpack.c.l.b16 %v181
    %v195 = vunpack.c.l.b16 %v182
    %v196 = vpack.c.b16 %v193, %v192
    %v197 = vpack.c.b16 %v195, %v194
    %v201 = vsel %vm133, %v178, 0
    %203 = vmatprep.subr.bf16.mxu0 0
    %204 = vmatpush1.bf16.msra.mxu0 0
    %205 = vmatprep.subr.bf16.mxu0 0
    %206 = vmatpush1.bf16.msra.mxu0 0
    %207 = vmatprep.subr.bf16.mxu0 0
    %208 = vmatpush1.bf16.msra.mxu0 0
    %209 = vmatprep.subr.bf16.mxu0 0
    %210 = vmatpush1.bf16.msra.mxu0 0
    %211 = vmatprep.subr.bf16.mxu0 0
    %212 = vmatpush1.bf16.msra.mxu0 0
    %213 = vmatprep.subr.bf16.mxu0 0
    %214 = vmatpush1.bf16.msra.mxu0 0
    %215 = vmatprep.subr.bf16.mxu0 0
    %216 = vmatpush1.bf16.msra.mxu0 %v197
    %217 = vmatprep.subr.bf16.mxu0 0
    %218 = vmatpush1.bf16.msra.mxu0 %v196
    %219 = vmatprep.subr.bf16.mxu0 0
    %220 = vmatpush2.bf16.msra.mxu0 0
    %221 = vmatprep.subr.bf16.mxu0 0
    %222 = vmatpush2.bf16.msra.mxu0 0
    %223 = vmatprep.subr.bf16.mxu0 0
    %224 = vmatpush2.bf16.msra.mxu0 0
    %225 = vmatprep.subr.bf16.mxu0 0
    %226 = vmatpush2.bf16.msra.mxu0 0
    %227 = vmatprep.subr.bf16.mxu0 0
    %228 = vmatpush2.bf16.msra.mxu0 0
    %229 = vmatprep.subr.bf16.mxu0 0
    %230 = vmatpush2.bf16.msra.mxu0 0
    %231 = vmatprep.subr.bf16.mxu0 0
    %232 = vmatpush2.bf16.msra.mxu0 0
    %233 = vmatprep.subr.bf16.mxu0 0
    %234 = vmatpush2.bf16.msra.mxu0 0
    %235 = vmatprep.mubr.bf16.mxu0 0
    %236 = vmatmul.mubr.bf16.gmra.mxu0 %v201
    %v237 = vpop.f32.mrf.mxu0
    %v238 = vadd.f32 %v187, %v237
    %v239 = vpop.f32.mrf.mxu0
    %v240 = vpop.f32.mrf.mxu0
    %v241 = vpop.f32.mrf.mxu0
    %242 = vdwg.mxu0
    %v243 = vmax.f32 %v238, 0.0
    %v244 = vpack.c.bf16 %v243, %v243
    %v245 = vld [vmem:[#allocation5 + $0x24] sm:$0xf]
    %v246 = vld [vmem:[#allocation5 + $0x28] sm:$0xf]
    %v247 = vld [vmem:[#allocation5 + $0x2c] sm:$0xf]
    %v248 = vld [vmem:[#allocation5 + $0x30] sm:$0xf]
    %v249 = vld [vmem:[#allocation7 + $0x18] sm:$0x1]
    %v250 = vlaneseq
    %v251 = vshrl.u32 %v250, 7
    %v252 = vsub.s32 0, %v251
    %v253 = vrot.slane %v249, %v252
    %v258 = vunpack.c.l.b16 %v245
    %v259 = vunpack.c.l.b16 %v246
    %v260 = vunpack.c.l.b16 %v247
    %v261 = vunpack.c.l.b16 %v248
    %v262 = vpack.c.b16 %v259, %v258
    %v263 = vpack.c.b16 %v261, %v260
    %v267 = vsel %vm133, %v244, 0
    %269 = vmatprep.subr.bf16.mxu0 0
    %270 = vmatpush1.bf16.msra.mxu0 0
    %271 = vmatprep.subr.bf16.mxu0 0
    %272 = vmatpush1.bf16.msra.mxu0 0
    %273 = vmatprep.subr.bf16.mxu0 0
    %274 = vmatpush1.bf16.msra.mxu0 0
    %275 = vmatprep.subr.bf16.mxu0 0
    %276 = vmatpush1.bf16.msra.mxu0 0
    %277 = vmatprep.subr.bf16.mxu0 0
    %278 = vmatpush1.bf16.msra.mxu0 0
    %279 = vmatprep.subr.bf16.mxu0 0
    %280 = vmatpush1.bf16.msra.mxu0 0
    %281 = vmatprep.subr.bf16.mxu0 0
    %282 = vmatpush1.bf16.msra.mxu0 %v263
    %283 = vmatprep.subr.bf16.mxu0 0
    %284 = vmatpush1.bf16.msra.mxu0 %v262
    %285 = vmatprep.subr.bf16.mxu0 0
    %286 = vmatpush2.bf16.msra.mxu0 0
    %287 = vmatprep.subr.bf16.mxu0 0
    %288 = vmatpush2.bf16.msra.mxu0 0
    %289 = vmatprep.subr.bf16.mxu0 0
    %290 = vmatpush2.bf16.msra.mxu0 0
    %291 = vmatprep.subr.bf16.mxu0 0
    %292 = vmatpush2.bf16.msra.mxu0 0
    %293 = vmatprep.subr.bf16.mxu0 0
    %294 = vmatpush2.bf16.msra.mxu0 0
    %295 = vmatprep.subr.bf16.mxu0 0
    %296 = vmatpush2.bf16.msra.mxu0 0
    %297 = vmatprep.subr.bf16.mxu0 0
    %298 = vmatpush2.bf16.msra.mxu0 0
    %299 = vmatprep.subr.bf16.mxu0 0
    %300 = vmatpush2.bf16.msra.mxu0 0
    %301 = vmatprep.mubr.bf16.mxu0 0
    %302 = vmatmul.mubr.bf16.gmra.mxu0 %v267
    %v303 = vpop.f32.mrf.mxu0
    %v304 = vadd.f32 %v253, %v303
    %v305 = vpop.f32.mrf.mxu0
    %v306 = vpop.f32.mrf.mxu0
    %v307 = vpop.f32.mrf.mxu0
    %308 = vdwg.mxu0
    %v309 = vmax.f32 %v304, 0.0
    %v310 = vpack.c.bf16 %v309, %v309
    %v311 = vld [vmem:[#allocation5 + $0x34] sm:$0xf]
    %v312 = vld [vmem:[#allocation5 + $0x38] sm:$0xf]
    %v313 = vld [vmem:[#allocation5 + $0x3c] sm:$0xf]
    %v314 = vld [vmem:[#allocation5 + $0x40] sm:$0xf]
    %v315 = vld [vmem:[#allocation7 + $0x20] sm:$0x1]
    %v316 = vlaneseq
    %v317 = vshrl.u32 %v316, 7
    %v318 = vsub.s32 0, %v317
    %v319 = vrot.slane %v315, %v318
    %v324 = vunpack.c.l.b16 %v311
    %v325 = vunpack.c.l.b16 %v312
    %v326 = vunpack.c.l.b16 %v313
    %v327 = vunpack.c.l.b16 %v314
    %v328 = vpack.c.b16 %v325, %v324
    %v329 = vpack.c.b16 %v327, %v326
    %v333 = vsel %vm133, %v310, 0
    %335 = vmatprep.subr.bf16.mxu0 0
    %336 = vmatpush1.bf16.msra.mxu0 0
    %337 = vmatprep.subr.bf16.mxu0 0
    %338 = vmatpush1.bf16.msra.mxu0 0
    %339 = vmatprep.subr.bf16.mxu0 0
    %340 = vmatpush1.bf16.msra.mxu0 0
    %341 = vmatprep.subr.bf16.mxu0 0
    %342 = vmatpush1.bf16.msra.mxu0 0
    %343 = vmatprep.subr.bf16.mxu0 0
    %344 = vmatpush1.bf16.msra.mxu0 0
    %345 = vmatprep.subr.bf16.mxu0 0
    %346 = vmatpush1.bf16.msra.mxu0 0
    %347 = vmatprep.subr.bf16.mxu0 0
    %348 = vmatpush1.bf16.msra.mxu0 %v329
    %349 = vmatprep.subr.bf16.mxu0 0
    %350 = vmatpush1.bf16.msra.mxu0 %v328
    %351 = vmatprep.subr.bf16.mxu0 0
    %352 = vmatpush2.bf16.msra.mxu0 0
    %353 = vmatprep.subr.bf16.mxu0 0
    %354 = vmatpush2.bf16.msra.mxu0 0
    %355 = vmatprep.subr.bf16.mxu0 0
    %356 = vmatpush2.bf16.msra.mxu0 0
    %357 = vmatprep.subr.bf16.mxu0 0
    %358 = vmatpush2.bf16.msra.mxu0 0
    %359 = vmatprep.subr.bf16.mxu0 0
    %360 = vmatpush2.bf16.msra.mxu0 0
    %361 = vmatprep.subr.bf16.mxu0 0
    %362 = vmatpush2.bf16.msra.mxu0 0
    %363 = vmatprep.subr.bf16.mxu0 0
    %364 = vmatpush2.bf16.msra.mxu0 0
    %365 = vmatprep.subr.bf16.mxu0 0
    %366 = vmatpush2.bf16.msra.mxu0 0
    %367 = vmatprep.mubr.bf16.mxu0 0
    %368 = vmatmul.mubr.bf16.gmra.mxu0 %v333
    %v369 = vpop.f32.mrf.mxu0
    %v370 = vadd.f32 %v319, %v369
    %v371 = vpop.f32.mrf.mxu0
    %v372 = vpop.f32.mrf.mxu0
    %v373 = vpop.f32.mrf.mxu0
    %374 = vdwg.mxu0
    %v375 = vmax.f32 %v370, 0.0
    %376 = vst.msk [vmem:[#allocation2] sm:$0xff] %vm62, %v54
    %378 = vrot.lane.b32.xlu0 %v375, 8
    %v379 = vpop.permute.xlu0 %378
    %vm381 = vcmask 97344
    %382 = vst.msk [vmem:[#allocation2] sm:$0xff] %vm381, %v379
    %383 = vst.msk [vmem:[#allocation2 + $0x8] sm:$0xff] %vm62, %v54
    %384 = vst.msk [vmem:[#allocation2 + $0x8] sm:$0xff] %vm381, %v379
    %385 = vst.msk [vmem:[#allocation2 + $0x10] sm:$0xff] %vm62, %v54
    %386 = vst.msk [vmem:[#allocation2 + $0x10] sm:$0xff] %vm381, %v379
    %387 = vst.msk [vmem:[#allocation2 + $0x18] sm:$0xff] %vm62, %v54
    %388 = vst.msk [vmem:[#allocation2 + $0x18] sm:$0xff] %vm381, %v379
    %389 = vst.msk [vmem:[#allocation2 + $0x20] sm:$0xff] %vm62, %v54
    %390 = vst.msk [vmem:[#allocation2 + $0x20] sm:$0xff] %vm381, %v379
    %391 = vst.msk [vmem:[#allocation2 + $0x28] sm:$0xff] %vm62, %v54
    %392 = vst.msk [vmem:[#allocation2 + $0x28] sm:$0xff] %vm381, %v379
    %393 = vst.msk [vmem:[#allocation2 + $0x30] sm:$0xff] %vm62, %v54
    %394 = vst.msk [vmem:[#allocation2 + $0x30] sm:$0xff] %vm381, %v379
    %395 = vst.msk [vmem:[#allocation2 + $0x38] sm:$0xff] %vm62, %v54
    %396 = vst.msk [vmem:[#allocation2 + $0x38] sm:$0xff] %vm381, %v379
    %397 = vst.msk [vmem:[#allocation2 + $0x40] sm:$0xff] %vm62, %v54
    %398 = vst.msk [vmem:[#allocation2 + $0x40] sm:$0xff] %vm381, %v379
    %399 = vst.msk [vmem:[#allocation2 + $0x48] sm:$0xff] %vm62, %v54
    %400 = vst.msk [vmem:[#allocation2 + $0x48] sm:$0xff] %vm381, %v379
    %v401 = vld [vmem:[#allocation2] sm:$0xff]
    %v402 = vld [vmem:[#allocation2 + $0x8] sm:$0xff]
    %v403 = vld [vmem:[#allocation2 + $0x10] sm:$0xff]
    %v404 = vld [vmem:[#allocation2 + $0x18] sm:$0xff]
    %v405 = vld [vmem:[#allocation2 + $0x20] sm:$0xff]
    %v406 = vld [vmem:[#allocation2 + $0x28] sm:$0xff]
    %v407 = vld [vmem:[#allocation2 + $0x30] sm:$0xff]
    %v408 = vld [vmem:[#allocation2 + $0x38] sm:$0xff]
    %v409 = vld [vmem:[#allocation2 + $0x40] sm:$0xff]
    %v410 = vld [vmem:[#allocation2 + $0x48] sm:$0xff]
    %v411 = vld [vmem:[#allocation7 + $0x48] sm:$0xff]
    %v412 = vld [vmem:[#allocation7 + $0x50] sm:$0xff]
    %v413 = vld [vmem:[#allocation7 + $0x58] sm:$0xff]
    %v414 = vld [vmem:[#allocation7 + $0x60] sm:$0xff]
    %v415 = vld [vmem:[#allocation7 + $0x68] sm:$0xff]
    %v416 = vld [vmem:[#allocation7 + $0x70] sm:$0xff]
    %v417 = vld [vmem:[#allocation7 + $0x78] sm:$0xff]
    %v418 = vld [vmem:[#allocation7 + $0x80] sm:$0xff]
    %v419 = vld [vmem:[#allocation7 + $0x88] sm:$0xff]
    %v420 = vld [vmem:[#allocation7 + $0x90] sm:$0xff]
    %v421 = vmul.f32 %v401, %v411
    %v422 = vmul.f32 %v402, %v412
    %v423 = vmul.f32 %v403, %v413
    %v424 = vmul.f32 %v404, %v414
    %v425 = vmul.f32 %v405, %v415
    %v426 = vmul.f32 %v406, %v416
    %v427 = vmul.f32 %v407, %v417
    %v428 = vmul.f32 %v408, %v418
    %v429 = vmul.f32 %v409, %v419
    %v430 = vmul.f32 %v410, %v420
    %v431 = vpack.c.bf16 %v422, %v421
    %v432 = vpack.c.bf16 %v424, %v423
    %v433 = vpack.c.bf16 %v426, %v425
    %v434 = vpack.c.bf16 %v428, %v427
    %v435 = vpack.c.bf16 %v430, %v429
    %v436 = vld [vmem:[#allocation5 + $0x44] sm:$0xf]
    %v437 = vld [vmem:[#allocation5 + $0x48] sm:$0x3]
    %v438 = vld [vmem:[#allocation7 + $0x28] sm:$0x1]
    %v439 = vlaneseq
    %v440 = vshrl.u32 %v439, 7
    %v441 = vsub.s32 0, %v440
    %v442 = vrot.slane %v438, %v441
    %v445 = vunpack.c.l.b16 %v436
    %v446 = vunpack.c.l.b16 %v437
    %v447 = vpack.c.b16 %v446, %v445
    %vm448 = vcmask 97280
    %v450 = vsel %vm448, %v431, 0
    %v453 = vsel %vm448, %v432, 0
    %v456 = vsel %vm448, %v433, 0
    %v459 = vsel %vm448, %v434, 0
    %v462 = vsel %vm448, %v435, 0
    %vm464 = vcmask 1045504
    %v466 = vsel %vm464, %v447, 0
    %468 = vmatprep.subr.bf16.mxu0 0
    %469 = vmatpush1.bf16.msra.mxu0 0
    %470 = vmatprep.subr.bf16.mxu0 0
    %471 = vmatpush1.bf16.msra.mxu0 0
    %472 = vmatprep.subr.bf16.mxu0 0
    %473 = vmatpush1.bf16.msra.mxu0 0
    %474 = vmatprep.subr.bf16.mxu0 0
    %475 = vmatpush1.bf16.msra.mxu0 0
    %476 = vmatprep.subr.bf16.mxu0 0
    %477 = vmatpush1.bf16.msra.mxu0 0
    %478 = vmatprep.subr.bf16.mxu0 0
    %479 = vmatpush1.bf16.msra.mxu0 0
    %480 = vmatprep.subr.bf16.mxu0 0
    %481 = vmatpush1.bf16.msra.mxu0 0
    %482 = vmatprep.subr.bf16.mxu0 0
    %483 = vmatpush1.bf16.msra.mxu0 %v466
    %484 = vmatprep.subr.bf16.mxu0 0
    %485 = vmatpush2.bf16.msra.mxu0 0
    %486 = vmatprep.subr.bf16.mxu0 0
    %487 = vmatpush2.bf16.msra.mxu0 0
    %488 = vmatprep.subr.bf16.mxu0 0
    %489 = vmatpush2.bf16.msra.mxu0 0
    %490 = vmatprep.subr.bf16.mxu0 0
    %491 = vmatpush2.bf16.msra.mxu0 0
    %492 = vmatprep.subr.bf16.mxu0 0
    %493 = vmatpush2.bf16.msra.mxu0 0
    %494 = vmatprep.subr.bf16.mxu0 0
    %495 = vmatpush2.bf16.msra.mxu0 0
    %496 = vmatprep.subr.bf16.mxu0 0
    %497 = vmatpush2.bf16.msra.mxu0 0
    %498 = vmatprep.subr.bf16.mxu0 0
    %499 = vmatpush2.bf16.msra.mxu0 0
    %500 = vmatprep.mubr.bf16.mxu0 0
    %501 = vmatmul.mubr.bf16.gmra.mxu0 %v450
    %v502 = vpop.f32.mrf.mxu0
    %v503 = vadd.f32 %v442, %v502
    %v504 = vpop.f32.mrf.mxu0
    %v505 = vpop.f32.mrf.mxu0
    %v506 = vadd.f32 %v442, %v505
    %v507 = vpop.f32.mrf.mxu0
    %508 = vmatprep.mubr.bf16.mxu0 0
    %509 = vmatmul.mubr.bf16.gmra.mxu0 %v453
    %v510 = vpop.f32.mrf.mxu0
    %v511 = vadd.f32 %v442, %v510
    %v512 = vpop.f32.mrf.mxu0
    %v513 = vpop.f32.mrf.mxu0
    %v514 = vadd.f32 %v442, %v513
    %v515 = vpop.f32.mrf.mxu0
    %516 = vmatprep.mubr.bf16.mxu0 0
    %517 = vmatmul.mubr.bf16.gmra.mxu0 %v456
    %v518 = vpop.f32.mrf.mxu0
    %v519 = vadd.f32 %v442, %v518
    %v520 = vpop.f32.mrf.mxu0
    %v521 = vpop.f32.mrf.mxu0
    %v522 = vadd.f32 %v442, %v521
    %v523 = vpop.f32.mrf.mxu0
    %524 = vmatprep.mubr.bf16.mxu0 0
    %525 = vmatmul.mubr.bf16.gmra.mxu0 %v459
    %v526 = vpop.f32.mrf.mxu0
    %v527 = vadd.f32 %v442, %v526
    %v528 = vpop.f32.mrf.mxu0
    %v529 = vpop.f32.mrf.mxu0
    %v530 = vadd.f32 %v442, %v529
    %v531 = vpop.f32.mrf.mxu0
    %532 = vmatprep.mubr.bf16.mxu0 0
    %533 = vmatmul.mubr.bf16.gmra.mxu0 %v462
    %v534 = vpop.f32.mrf.mxu0
    %v535 = vadd.f32 %v442, %v534
    %v536 = vpop.f32.mrf.mxu0
    %v537 = vpop.f32.mrf.mxu0
    %v538 = vadd.f32 %v442, %v537
    %v539 = vpop.f32.mrf.mxu0
    %540 = vdwg.mxu0
    %v541 = vmax.f32 %v503, 0.0
    %v542 = vmax.f32 %v506, 0.0
    %v543 = vmax.f32 %v511, 0.0
    %v544 = vmax.f32 %v514, 0.0
    %v545 = vmax.f32 %v519, 0.0
    %v546 = vmax.f32 %v522, 0.0
    %v547 = vmax.f32 %v527, 0.0
    %v548 = vmax.f32 %v530, 0.0
    %v549 = vmax.f32 %v535, 0.0
    %v550 = vmax.f32 %v538, 0.0
    %v551 = vpack.c.bf16 %v542, %v541
    %v552 = vpack.c.bf16 %v544, %v543
    %v553 = vpack.c.bf16 %v546, %v545
    %v554 = vpack.c.bf16 %v548, %v547
    %v555 = vpack.c.bf16 %v550, %v549
    %v556 = vld [vmem:[#allocation5 + $0x4c] sm:$0xf]
    %v557 = vld [vmem:[#allocation5 + $0x50] sm:$0xf]
    %v558 = vld [vmem:[#allocation5 + $0x54] sm:$0xf]
    %v559 = vld [vmem:[#allocation5 + $0x58] sm:$0xf]
    %v560 = vld [vmem:[#allocation7 + $0x30] sm:$0x1]
    %v561 = vlaneseq
    %v562 = vshrl.u32 %v561, 7
    %v563 = vsub.s32 0, %v562
    %v564 = vrot.slane %v560, %v563
    %v569 = vunpack.c.l.b16 %v556
    %v570 = vunpack.c.l.b16 %v557
    %v571 = vunpack.c.l.b16 %v558
    %v572 = vunpack.c.l.b16 %v559
    %v573 = vpack.c.b16 %v570, %v569
    %v574 = vpack.c.b16 %v572, %v571
    %v578 = vsel %vm133, %v551, 0
    %v581 = vsel %vm133, %v552, 0
    %v584 = vsel %vm133, %v553, 0
    %v587 = vsel %vm133, %v554, 0
    %v590 = vsel %vm133, %v555, 0
    %592 = vmatprep.subr.bf16.mxu0 0
    %593 = vmatpush1.bf16.msra.mxu0 0
    %594 = vmatprep.subr.bf16.mxu0 0
    %595 = vmatpush1.bf16.msra.mxu0 0
    %596 = vmatprep.subr.bf16.mxu0 0
    %597 = vmatpush1.bf16.msra.mxu0 0
    %598 = vmatprep.subr.bf16.mxu0 0
    %599 = vmatpush1.bf16.msra.mxu0 0
    %600 = vmatprep.subr.bf16.mxu0 0
    %601 = vmatpush1.bf16.msra.mxu0 0
    %602 = vmatprep.subr.bf16.mxu0 0
    %603 = vmatpush1.bf16.msra.mxu0 0
    %604 = vmatprep.subr.bf16.mxu0 0
    %605 = vmatpush1.bf16.msra.mxu0 %v574
    %606 = vmatprep.subr.bf16.mxu0 0
    %607 = vmatpush1.bf16.msra.mxu0 %v573
    %608 = vmatprep.subr.bf16.mxu0 0
    %609 = vmatpush2.bf16.msra.mxu0 0
    %610 = vmatprep.subr.bf16.mxu0 0
    %611 = vmatpush2.bf16.msra.mxu0 0
    %612 = vmatprep.subr.bf16.mxu0 0
    %613 = vmatpush2.bf16.msra.mxu0 0
    %614 = vmatprep.subr.bf16.mxu0 0
    %615 = vmatpush2.bf16.msra.mxu0 0
    %616 = vmatprep.subr.bf16.mxu0 0
    %617 = vmatpush2.bf16.msra.mxu0 0
    %618 = vmatprep.subr.bf16.mxu0 0
    %619 = vmatpush2.bf16.msra.mxu0 0
    %620 = vmatprep.subr.bf16.mxu0 0
    %621 = vmatpush2.bf16.msra.mxu0 0
    %622 = vmatprep.subr.bf16.mxu0 0
    %623 = vmatpush2.bf16.msra.mxu0 0
    %624 = vmatprep.mubr.bf16.mxu0 0
    %625 = vmatmul.mubr.bf16.gmra.mxu0 %v578
    %v626 = vpop.f32.mrf.mxu0
    %v627 = vadd.f32 %v564, %v626
    %v628 = vpop.f32.mrf.mxu0
    %v629 = vpop.f32.mrf.mxu0
    %v630 = vadd.f32 %v564, %v629
    %v631 = vpop.f32.mrf.mxu0
    %632 = vmatprep.mubr.bf16.mxu0 0
    %633 = vmatmul.mubr.bf16.gmra.mxu0 %v581
    %v634 = vpop.f32.mrf.mxu0
    %v635 = vadd.f32 %v564, %v634
    %v636 = vpop.f32.mrf.mxu0
    %v637 = vpop.f32.mrf.mxu0
    %v638 = vadd.f32 %v564, %v637
    %v639 = vpop.f32.mrf.mxu0
    %640 = vmatprep.mubr.bf16.mxu0 0
    %641 = vmatmul.mubr.bf16.gmra.mxu0 %v584
    %v642 = vpop.f32.mrf.mxu0
    %v643 = vadd.f32 %v564, %v642
    %v644 = vpop.f32.mrf.mxu0
    %v645 = vpop.f32.mrf.mxu0
    %v646 = vadd.f32 %v564, %v645
    %v647 = vpop.f32.mrf.mxu0
    %648 = vmatprep.mubr.bf16.mxu0 0
    %649 = vmatmul.mubr.bf16.gmra.mxu0 %v587
    %v650 = vpop.f32.mrf.mxu0
    %v651 = vadd.f32 %v564, %v650
    %v652 = vpop.f32.mrf.mxu0
    %v653 = vpop.f32.mrf.mxu0
    %v654 = vadd.f32 %v564, %v653
    %v655 = vpop.f32.mrf.mxu0
    %656 = vmatprep.mubr.bf16.mxu0 0
    %657 = vmatmul.mubr.bf16.gmra.mxu0 %v590
    %v658 = vpop.f32.mrf.mxu0
    %v659 = vadd.f32 %v564, %v658
    %v660 = vpop.f32.mrf.mxu0
    %v661 = vpop.f32.mrf.mxu0
    %v662 = vadd.f32 %v564, %v661
    %v663 = vpop.f32.mrf.mxu0
    %664 = vdwg.mxu0
    %v665 = vmax.f32 %v627, 0.0
    %v666 = vmax.f32 %v630, 0.0
    %v667 = vmax.f32 %v635, 0.0
    %v668 = vmax.f32 %v638, 0.0
    %v669 = vmax.f32 %v643, 0.0
    %v670 = vmax.f32 %v646, 0.0
    %v671 = vmax.f32 %v651, 0.0
    %v672 = vmax.f32 %v654, 0.0
    %v673 = vmax.f32 %v659, 0.0
    %v674 = vmax.f32 %v662, 0.0
    %v675 = vpack.c.bf16 %v666, %v665
    %v676 = vpack.c.bf16 %v668, %v667
    %v677 = vpack.c.bf16 %v670, %v669
    %v678 = vpack.c.bf16 %v672, %v671
    %v679 = vpack.c.bf16 %v674, %v673
    %v680 = vld [vmem:[#allocation5 + $0x5c] sm:$0xf]
    %v681 = vld [vmem:[#allocation5 + $0x60] sm:$0xf]
    %v682 = vld [vmem:[#allocation5 + $0x64] sm:$0xf]
    %v683 = vld [vmem:[#allocation5 + $0x68] sm:$0xf]
    %v684 = vld [vmem:[#allocation7 + $0x38] sm:$0x1]
    %v685 = vlaneseq
    %v686 = vshrl.u32 %v685, 7
    %v687 = vsub.s32 0, %v686
    %v688 = vrot.slane %v684, %v687
    %v693 = vunpack.c.l.b16 %v680
    %v694 = vunpack.c.l.b16 %v681
    %v695 = vunpack.c.l.b16 %v682
    %v696 = vunpack.c.l.b16 %v683
    %v697 = vpack.c.b16 %v694, %v693
    %v698 = vpack.c.b16 %v696, %v695
    %v702 = vsel %vm133, %v675, 0
    %v705 = vsel %vm133, %v676, 0
    %v708 = vsel %vm133, %v677, 0
    %v711 = vsel %vm133, %v678, 0
    %v714 = vsel %vm133, %v679, 0
    %716 = vmatprep.subr.bf16.mxu0 0
    %717 = vmatpush1.bf16.msra.mxu0 0
    %718 = vmatprep.subr.bf16.mxu0 0
    %719 = vmatpush1.bf16.msra.mxu0 0
    %720 = vmatprep.subr.bf16.mxu0 0
    %721 = vmatpush1.bf16.msra.mxu0 0
    %722 = vmatprep.subr.bf16.mxu0 0
    %723 = vmatpush1.bf16.msra.mxu0 0
    %724 = vmatprep.subr.bf16.mxu0 0
    %725 = vmatpush1.bf16.msra.mxu0 0
    %726 = vmatprep.subr.bf16.mxu0 0
    %727 = vmatpush1.bf16.msra.mxu0 0
    %728 = vmatprep.subr.bf16.mxu0 0
    %729 = vmatpush1.bf16.msra.mxu0 %v698
    %730 = vmatprep.subr.bf16.mxu0 0
    %731 = vmatpush1.bf16.msra.mxu0 %v697
    %732 = vmatprep.subr.bf16.mxu0 0
    %733 = vmatpush2.bf16.msra.mxu0 0
    %734 = vmatprep.subr.bf16.mxu0 0
    %735 = vmatpush2.bf16.msra.mxu0 0
    %736 = vmatprep.subr.bf16.mxu0 0
    %737 = vmatpush2.bf16.msra.mxu0 0
    %738 = vmatprep.subr.bf16.mxu0 0
    %739 = vmatpush2.bf16.msra.mxu0 0
    %740 = vmatprep.subr.bf16.mxu0 0
    %741 = vmatpush2.bf16.msra.mxu0 0
    %742 = vmatprep.subr.bf16.mxu0 0
    %743 = vmatpush2.bf16.msra.mxu0 0
    %744 = vmatprep.subr.bf16.mxu0 0
    %745 = vmatpush2.bf16.msra.mxu0 0
    %746 = vmatprep.subr.bf16.mxu0 0
    %747 = vmatpush2.bf16.msra.mxu0 0
    %748 = vmatprep.mubr.bf16.mxu0 0
    %749 = vmatmul.mubr.bf16.gmra.mxu0 %v702
    %v750 = vpop.f32.mrf.mxu0
    %v751 = vadd.f32 %v688, %v750
    %v752 = vpop.f32.mrf.mxu0
    %v753 = vpop.f32.mrf.mxu0
    %v754 = vadd.f32 %v688, %v753
    %v755 = vpop.f32.mrf.mxu0
    %756 = vmatprep.mubr.bf16.mxu0 0
    %757 = vmatmul.mubr.bf16.gmra.mxu0 %v705
    %v758 = vpop.f32.mrf.mxu0
    %v759 = vadd.f32 %v688, %v758
    %v760 = vpop.f32.mrf.mxu0
    %v761 = vpop.f32.mrf.mxu0
    %v762 = vadd.f32 %v688, %v761
    %v763 = vpop.f32.mrf.mxu0
    %764 = vmatprep.mubr.bf16.mxu0 0
    %765 = vmatmul.mubr.bf16.gmra.mxu0 %v708
    %v766 = vpop.f32.mrf.mxu0
    %v767 = vadd.f32 %v688, %v766
    %v768 = vpop.f32.mrf.mxu0
    %v769 = vpop.f32.mrf.mxu0
    %v770 = vadd.f32 %v688, %v769
    %v771 = vpop.f32.mrf.mxu0
    %772 = vmatprep.mubr.bf16.mxu0 0
    %773 = vmatmul.mubr.bf16.gmra.mxu0 %v711
    %v774 = vpop.f32.mrf.mxu0
    %v775 = vadd.f32 %v688, %v774
    %v776 = vpop.f32.mrf.mxu0
    %v777 = vpop.f32.mrf.mxu0
    %v778 = vadd.f32 %v688, %v777
    %v779 = vpop.f32.mrf.mxu0
    %780 = vmatprep.mubr.bf16.mxu0 0
    %781 = vmatmul.mubr.bf16.gmra.mxu0 %v714
    %v782 = vpop.f32.mrf.mxu0
    %v783 = vadd.f32 %v688, %v782
    %v784 = vpop.f32.mrf.mxu0
    %v785 = vpop.f32.mrf.mxu0
    %v786 = vadd.f32 %v688, %v785
    %v787 = vpop.f32.mrf.mxu0
    %788 = vdwg.mxu0
    %v789 = vmax.f32 %v751, 0.0
    %v790 = vmax.f32 %v754, 0.0
    %v791 = vmax.f32 %v759, 0.0
    %v792 = vmax.f32 %v762, 0.0
    %v793 = vmax.f32 %v767, 0.0
    %v794 = vmax.f32 %v770, 0.0
    %v795 = vmax.f32 %v775, 0.0
    %v796 = vmax.f32 %v778, 0.0
    %v797 = vmax.f32 %v783, 0.0
    %v798 = vmax.f32 %v786, 0.0
    %v799 = vpack.c.bf16 %v790, %v789
    %v800 = vpack.c.bf16 %v792, %v791
    %v801 = vpack.c.bf16 %v794, %v793
    %v802 = vpack.c.bf16 %v796, %v795
    %v803 = vpack.c.bf16 %v798, %v797
    %v804 = vld [vmem:[#allocation5 + $0x6c] sm:$0xf]
    %v805 = vld [vmem:[#allocation5 + $0x70] sm:$0xf]
    %v806 = vld [vmem:[#allocation5 + $0x74] sm:$0xf]
    %v807 = vld [vmem:[#allocation5 + $0x78] sm:$0xf]
    %v808 = vld [vmem:[#allocation7 + $0x40] sm:$0x1]
    %v809 = vlaneseq
    %v810 = vshrl.u32 %v809, 7
    %v811 = vsub.s32 0, %v810
    %v812 = vrot.slane %v808, %v811
    %v817 = vunpack.c.l.b16 %v804
    %v818 = vunpack.c.l.b16 %v805
    %v819 = vunpack.c.l.b16 %v806
    %v820 = vunpack.c.l.b16 %v807
    %v821 = vpack.c.b16 %v818, %v817
    %v822 = vpack.c.b16 %v820, %v819
    %v826 = vsel %vm133, %v799, 0
    %v829 = vsel %vm133, %v800, 0
    %v832 = vsel %vm133, %v801, 0
    %v835 = vsel %vm133, %v802, 0
    %v838 = vsel %vm133, %v803, 0
    %840 = vmatprep.subr.bf16.mxu0 0
    %841 = vmatpush1.bf16.msra.mxu0 0
    %842 = vmatprep.subr.bf16.mxu0 0
    %843 = vmatpush1.bf16.msra.mxu0 0
    %844 = vmatprep.subr.bf16.mxu0 0
    %845 = vmatpush1.bf16.msra.mxu0 0
    %846 = vmatprep.subr.bf16.mxu0 0
    %847 = vmatpush1.bf16.msra.mxu0 0
    %848 = vmatprep.subr.bf16.mxu0 0
    %849 = vmatpush1.bf16.msra.mxu0 0
    %850 = vmatprep.subr.bf16.mxu0 0
    %851 = vmatpush1.bf16.msra.mxu0 0
    %852 = vmatprep.subr.bf16.mxu0 0
    %853 = vmatpush1.bf16.msra.mxu0 %v822
    %854 = vmatprep.subr.bf16.mxu0 0
    %855 = vmatpush1.bf16.msra.mxu0 %v821
    %856 = vmatprep.subr.bf16.mxu0 0
    %857 = vmatpush2.bf16.msra.mxu0 0
    %858 = vmatprep.subr.bf16.mxu0 0
    %859 = vmatpush2.bf16.msra.mxu0 0
    %860 = vmatprep.subr.bf16.mxu0 0
    %861 = vmatpush2.bf16.msra.mxu0 0
    %862 = vmatprep.subr.bf16.mxu0 0
    %863 = vmatpush2.bf16.msra.mxu0 0
    %864 = vmatprep.subr.bf16.mxu0 0
    %865 = vmatpush2.bf16.msra.mxu0 0
    %866 = vmatprep.subr.bf16.mxu0 0
    %867 = vmatpush2.bf16.msra.mxu0 0
    %868 = vmatprep.subr.bf16.mxu0 0
    %869 = vmatpush2.bf16.msra.mxu0 0
    %870 = vmatprep.subr.bf16.mxu0 0
    %871 = vmatpush2.bf16.msra.mxu0 0
    %872 = vmatprep.mubr.bf16.mxu0 0
    %873 = vmatmul.mubr.bf16.gmra.mxu0 %v826
    %v874 = vpop.f32.mrf.mxu0
    %v875 = vadd.f32 %v812, %v874
    %v876 = vpop.f32.mrf.mxu0
    %v877 = vpop.f32.mrf.mxu0
    %v878 = vadd.f32 %v812, %v877
    %v879 = vpop.f32.mrf.mxu0
    %880 = vmatprep.mubr.bf16.mxu0 0
    %881 = vmatmul.mubr.bf16.gmra.mxu0 %v829
    %v882 = vpop.f32.mrf.mxu0
    %v883 = vadd.f32 %v812, %v882
    %v884 = vpop.f32.mrf.mxu0
    %v885 = vpop.f32.mrf.mxu0
    %v886 = vadd.f32 %v812, %v885
    %v887 = vpop.f32.mrf.mxu0
    %888 = vmatprep.mubr.bf16.mxu0 0
    %889 = vmatmul.mubr.bf16.gmra.mxu0 %v832
    %v890 = vpop.f32.mrf.mxu0
    %v891 = vadd.f32 %v812, %v890
    %v892 = vpop.f32.mrf.mxu0
    %v893 = vpop.f32.mrf.mxu0
    %v894 = vadd.f32 %v812, %v893
    %v895 = vpop.f32.mrf.mxu0
    %896 = vmatprep.mubr.bf16.mxu0 0
    %897 = vmatmul.mubr.bf16.gmra.mxu0 %v835
    %v898 = vpop.f32.mrf.mxu0
    %v899 = vadd.f32 %v812, %v898
    %v900 = vpop.f32.mrf.mxu0
    %v901 = vpop.f32.mrf.mxu0
    %v902 = vadd.f32 %v812, %v901
    %v903 = vpop.f32.mrf.mxu0
    %904 = vmatprep.mubr.bf16.mxu0 0
    %905 = vmatmul.mubr.bf16.gmra.mxu0 %v838
    %v906 = vpop.f32.mrf.mxu0
    %v907 = vadd.f32 %v812, %v906
    %v908 = vpop.f32.mrf.mxu0
    %v909 = vpop.f32.mrf.mxu0
    %v910 = vadd.f32 %v812, %v909
    %v911 = vpop.f32.mrf.mxu0
    %912 = vdwg.mxu0
    %vm913 = vcmp.gt.f32.partialorder %v875, 0.0
    %vm914 = vcmp.gt.f32.partialorder %v878, 0.0
    %vm915 = vcmp.gt.f32.partialorder %v883, 0.0
    %vm916 = vcmp.gt.f32.partialorder %v886, 0.0
    %vm917 = vcmp.gt.f32.partialorder %v891, 0.0
    %vm918 = vcmp.gt.f32.partialorder %v894, 0.0
    %vm919 = vcmp.gt.f32.partialorder %v899, 0.0
    %vm920 = vcmp.gt.f32.partialorder %v902, 0.0
    %vm921 = vcmp.gt.f32.partialorder %v907, 0.0
    %vm922 = vcmp.gt.f32.partialorder %v910, 0.0
    %v923 = vadd.f32 %v875, 1.0
    %v924 = vadd.f32 %v878, 1.0
    %v925 = vadd.f32 %v883, 1.0
    %v926 = vadd.f32 %v886, 1.0
    %v927 = vadd.f32 %v891, 1.0
    %v928 = vadd.f32 %v894, 1.0
    %v929 = vadd.f32 %v899, 1.0
    %v930 = vadd.f32 %v902, 1.0
    %v931 = vadd.f32 %v907, 1.0
    %v932 = vadd.f32 %v910, 1.0
    %v933 = vmin.f32 %v875, 0.0
    %v934 = vmin.f32 %v878, 0.0
    %v935 = vmin.f32 %v883, 0.0
    %v936 = vmin.f32 %v886, 0.0
    %v937 = vmin.f32 %v891, 0.0
    %v938 = vmin.f32 %v894, 0.0
    %v939 = vmin.f32 %v899, 0.0
    %v940 = vmin.f32 %v902, 0.0
    %v941 = vmin.f32 %v907, 0.0
    %v942 = vmin.f32 %v910, 0.0
    %v943 = vmul.f32 %v933, 1.442695
    %v944 = vpow.pop %v943
    %v945 = vmul.f32 %v934, 1.442695
    %v946 = vpow.pop %v945
    %v947 = vmul.f32 %v935, 1.442695
    %v948 = vpow.pop %v947
    %v949 = vmul.f32 %v936, 1.442695
    %v950 = vpow.pop %v949
    %v951 = vmul.f32 %v937, 1.442695
    %v952 = vpow.pop %v951
    %v953 = vmul.f32 %v938, 1.442695
    %v954 = vpow.pop %v953
    %v955 = vmul.f32 %v939, 1.442695
    %v956 = vpow.pop %v955
    %v957 = vmul.f32 %v940, 1.442695
    %v958 = vpow.pop %v957
    %v959 = vmul.f32 %v941, 1.442695
    %v960 = vpow.pop %v959
    %v961 = vmul.f32 %v942, 1.442695
    %v962 = vpow.pop %v961
    %v963 = vsel %vm913, %v923, %v944
    %v964 = vsel %vm914, %v924, %v946
    %v965 = vsel %vm915, %v925, %v948
    %v966 = vsel %vm916, %v926, %v950
    %v967 = vsel %vm917, %v927, %v952
    %v968 = vsel %vm918, %v928, %v954
    %v969 = vsel %vm919, %v929, %v956
    %v970 = vsel %vm920, %v930, %v958
    %v971 = vsel %vm921, %v931, %v960
    %v972 = vsel %vm922, %v932, %v962
    %v973 = vmul.f32 %v963, %v401
    %v974 = vmul.f32 %v964, %v402
    %v975 = vmul.f32 %v965, %v403
    %v976 = vmul.f32 %v966, %v404
    %v977 = vmul.f32 %v967, %v405
    %v978 = vmul.f32 %v968, %v406
    %v979 = vmul.f32 %v969, %v407
    %v980 = vmul.f32 %v970, %v408
    %v981 = vmul.f32 %v971, %v409
    %v982 = vmul.f32 %v972, %v410
    %v983 = vsel %vm62, %v973, 0.0
    %984 = vadd.xlane.f32.xlu0 %v983
    %v985 = vpop.xlane.xlu0 %984
    %v986 = vsel %vm62, %v974, 0.0
    %987 = vadd.xlane.f32.xlu0 %v986
    %v988 = vpop.xlane.xlu0 %987
    %v989 = vsel %vm62, %v975, 0.0
    %990 = vadd.xlane.f32.xlu0 %v989
    %v991 = vpop.xlane.xlu0 %990
    %v992 = vsel %vm62, %v976, 0.0
    %993 = vadd.xlane.f32.xlu0 %v992
    %v994 = vpop.xlane.xlu0 %993
    %v995 = vsel %vm62, %v977, 0.0
    %996 = vadd.xlane.f32.xlu0 %v995
    %v997 = vpop.xlane.xlu0 %996
    %v998 = vsel %vm62, %v978, 0.0
    %999 = vadd.xlane.f32.xlu0 %v998
    %v1000 = vpop.xlane.xlu0 %999
    %v1001 = vsel %vm62, %v979, 0.0
    %1002 = vadd.xlane.f32.xlu0 %v1001
    %v1003 = vpop.xlane.xlu0 %1002
    %v1004 = vsel %vm62, %v980, 0.0
    %1005 = vadd.xlane.f32.xlu0 %v1004
    %v1006 = vpop.xlane.xlu0 %1005
    %v1007 = vsel %vm62, %v981, 0.0
    %1008 = vadd.xlane.f32.xlu0 %v1007
    %v1009 = vpop.xlane.xlu0 %1008
    %v1010 = vsel %vm62, %v982, 0.0
    %1011 = vadd.xlane.f32.xlu0 %v1010
    %v1012 = vpop.xlane.xlu0 %1011
    %v1013 = vld [vmem:[#allocation7 + $0x98] sm:$0xff]
    %vm1014 = vcmask 654336
    %v1016 = vsel %vm1014, %v1013, 0
    %1018 = vmatprep.subr.mxu0 0.0
    %1019 = vmatpush1.msra.mxu0 0.0
    %1020 = vmatprep.subr.mxu0 0.0
    %1021 = vmatpush1.msra.mxu0 0.0
    %1022 = vmatprep.subr.mxu0 0.0
    %1023 = vmatpush1.msra.mxu0 0.0
    %1024 = vmatprep.subr.mxu0 0.0
    %1025 = vmatpush1.msra.mxu0 0.0
    %1026 = vmatprep.subr.mxu0 0.0
    %1027 = vmatpush1.msra.mxu0 0.0
    %1028 = vmatprep.subr.mxu0 0.0
    %1029 = vmatpush1.msra.mxu0 0.0
    %1030 = vmatprep.subr.mxu0 0.0
    %1031 = vmatpush1.msra.mxu0 %v1012
    %1032 = vmatprep.subr.mxu0 0.0
    %1033 = vmatpush1.msra.mxu0 %v1009
    %1034 = vmatprep.subr.mxu0 0.0
    %1035 = vmatpush1.msra.mxu0 %v1006
    %1036 = vmatprep.subr.mxu0 0.0
    %1037 = vmatpush1.msra.mxu0 %v1003
    %1038 = vmatprep.subr.mxu0 0.0
    %1039 = vmatpush1.msra.mxu0 %v1000
    %1040 = vmatprep.subr.mxu0 0.0
    %1041 = vmatpush1.msra.mxu0 %v997
    %1042 = vmatprep.subr.mxu0 0.0
    %1043 = vmatpush1.msra.mxu0 %v994
    %1044 = vmatprep.subr.mxu0 0.0
    %1045 = vmatpush1.msra.mxu0 %v991
    %1046 = vmatprep.subr.mxu0 0.0
    %1047 = vmatpush1.msra.mxu0 %v988
    %1048 = vmatprep.subr.mxu0 0.0
    %1049 = vmatpush1.msra.mxu0 %v985
    %1050 = vmatprep.subr.mxu0 0.0
    %1051 = vmatpush2.msra.mxu0 0.0
    %1052 = vmatprep.subr.mxu0 0.0
    %1053 = vmatpush2.msra.mxu0 0.0
    %1054 = vmatprep.subr.mxu0 0.0
    %1055 = vmatpush2.msra.mxu0 0.0
    %1056 = vmatprep.subr.mxu0 0.0
    %1057 = vmatpush2.msra.mxu0 0.0
    %1058 = vmatprep.subr.mxu0 0.0
    %1059 = vmatpush2.msra.mxu0 0.0
    %1060 = vmatprep.subr.mxu0 0.0
    %1061 = vmatpush2.msra.mxu0 0.0
    %1062 = vmatprep.subr.mxu0 0.0
    %1063 = vmatpush2.msra.mxu0 0.0
    %1064 = vmatprep.subr.mxu0 0.0
    %1065 = vmatpush2.msra.mxu0 0.0
    %1066 = vmatprep.subr.mxu0 0.0
    %1067 = vmatpush2.msra.mxu0 0.0
    %1068 = vmatprep.subr.mxu0 0.0
    %1069 = vmatpush2.msra.mxu0 0.0
    %1070 = vmatprep.subr.mxu0 0.0
    %1071 = vmatpush2.msra.mxu0 0.0
    %1072 = vmatprep.subr.mxu0 0.0
    %1073 = vmatpush2.msra.mxu0 0.0
    %1074 = vmatprep.subr.mxu0 0.0
    %1075 = vmatpush2.msra.mxu0 0.0
    %1076 = vmatprep.subr.mxu0 0.0
    %1077 = vmatpush2.msra.mxu0 0.0
    %1078 = vmatprep.subr.mxu0 0.0
    %1079 = vmatpush2.msra.mxu0 0.0
    %1080 = vmatprep.subr.mxu0 0.0
    %1081 = vmatpush2.msra.mxu0 0.0
    %1082 = vmatprep.mubr.f32.mxu0 0.0
    %1083 = vmatmul.mubr.f32.gmra.mxu0 %v1016
    %v1084 = vpop.f32.mrf.mxu0
    %v1085 = vadd.f32 0.0, %v1084
    %v1086 = vpop.f32.mrf.mxu0
    %1087 = vdwg.mxu0
    %v1088 = vsub.f32 0.0, %v1085
    %v1089 = vmul.f32 %v1088, 1.442695
    %v1090 = vpow.pop %v1089
    %v1091 = vadd.f32 %v1090, 1.0
    %v1092 = vrcp.pop %v1091
    %v1093 = vmul.f32 1.0, %v1092
    %vm1094 = vcmask 7168
    %1095 = vst.msk [vmem:[%s3] sm:$0xff] %vm1094, %v1093
    // Predicated region
    $region26: #{tpu_custom_call.1} parent=1 // pred_check
      _
    $region27: #{tpu_custom_call.1} parent=1 // pred_check_branch
      %1097 = sbr.rel (0) target = $region29
    $region28: #{tpu_custom_call.1} parent=1 // pred_region
      _
    $region29: #{tpu_custom_call.1} parent=1 // pred_fallthru
      _
    // Predicated region
    $region30: #{tpu_custom_call.1} parent=1 // pred_check
      _
    $region31: #{tpu_custom_call.1} parent=1 // pred_check_branch
      %1099 = sbr.rel (0) target = $region33
    $region32: #{tpu_custom_call.1} parent=1 // pred_region
      _
    $region33: #{tpu_custom_call.1} parent=1 // pred_fallthru
      _
    %1100 = vsyncpa [#allocation4], 1
    %1101 = vsyncpa [#allocation6], 1

</llo_original>
